<compile_context>
chip_gen: v7x
topology: tpu7x:2x2x1
jax: 0.10.0
libtpu: 0.0.40
codegen_flags: <defaults>
</compile_context>

<pallas_src>
import jax
import jax.numpy as jnp
import numpy as np
from jax.experimental import pallas as pl
from jax.experimental.pallas import tpu as pltpu
from jax.scipy.linalg import block_diag


def _round_up(x: int, m: int) -> int:
    return ((x + m - 1) // m) * m


def countnet_kernel(x_ref, z_ref, w1_ref, b1_ref, w2_ref, b2_ref,
                    w3_ref, wz_ref, b3_ref, o_ref):
    """One row-tile of the packed forward pass.

    x_ref : (tm_r, p*F)  -- p logical rows packed onto the lanes of each row
    z_ref : (tm_r, p*C)
    w*_ref: block-diagonal weights (p copies), VMEM-resident across grid steps
    b3_ref: scalar marginal-head bias in SMEM
    o_ref : (tm_r, p)    -- exp(xb + zv + b3) for the p packed rows
    """
    # Hidden layers: MXU matmuls with f32 accumulation, bias+ReLU on the VPU.
    h = jnp.dot(x_ref[...], w1_ref[...], preferred_element_type=jnp.float32)
    h = jnp.maximum(h + b1_ref[...], 0.0).astype(w2_ref.dtype)
    h = jnp.dot(h, w2_ref[...], preferred_element_type=jnp.float32)
    h = jnp.maximum(h + b2_ref[...], 0.0).astype(w3_ref.dtype)
    # Packed heads: column j of xb/zv is the scalar head output of packed row j.
    xb = jnp.dot(h, w3_ref[...], preferred_element_type=jnp.float32)
    zv = jnp.dot(z_ref[...], wz_ref[...], preferred_element_type=jnp.float32)
    # Fused heads: exp(xb + b3) * exp(zv) == exp(xb + zv + b3)  (one EUP op).
    o_ref[...] = jnp.exp(xb + zv + b3_ref[0])


def countnet_forward(x, z, params, *, tm=None, compute_dtype=jnp.float32):
    """CountNet forward: exp(MLP(x)) * exp(z @ wz), returned as (N, 1) float32.

    x: (N, F), z: (N, C).
    params: w1 (F,H1), b1 (1,H1), w2 (H1,H2), b2 (1,H2), w3 (H2,1), b3 (1,1),
            wz (C,1).
    tm: optional row-tile size in *logical* rows (auto-chosen if None).
    compute_dtype: dtype used for streamed X/Z and the matmul weights
                   (f32 default; bf16 halves HBM traffic, f32 accumulation).
    """
    n, f = x.shape
    nz, c = z.shape
    assert nz == n, "X and Z must have the same number of rows"

    cdt = jnp.dtype(compute_dtype)
    dt_bytes = cdt.itemsize

    w1 = params["w1"].astype(jnp.float32)
    b1 = params["b1"].reshape(1, -1).astype(jnp.float32)
    w2 = params["w2"].astype(jnp.float32)
    b2 = params["b2"].reshape(1, -1).astype(jnp.float32)
    w3 = params["w3"].reshape(-1, 1).astype(jnp.float32)
    wz = params["wz"].reshape(-1, 1).astype(jnp.float32)
    b3 = params["b3"].reshape(1).astype(jnp.float32)        # scalar -> SMEM
    h1 = w1.shape[1]
    h2 = w2.shape[1]

    # ---- Pack factor: p logical rows per physical (lane) row. -------------
    # Chosen so the widest packed operand is ~128-256 lanes (p=8 for the
    # module's 32/16/32 widths -> 256-lane hidden activations, 8-lane output).
    widest = max(f, c, h1, h2, 1)
    p = max(1, min(8, 256 // widest))

    x = x.astype(cdt)
    z = z.astype(cdt)
    n_pad = _round_up(n, p)
    if n_pad != n:
        # A handful of zero rows so the free (N,F)->(N/p, p*F) reshape is
        # valid; padded rows produce finite garbage that is sliced off below.
        x = jnp.pad(x, ((0, n_pad - n), (0, 0)))
        z = jnp.pad(z, ((0, n_pad - n), (0, 0)))
    n_prow = n_pad // p

    # Free (metadata-only) reshapes: p consecutive logical rows ride the lanes.
    xp = x.reshape(n_prow, p * f)
    zp = z.reshape(n_prow, p * c)

    # Block-diagonal weights (p copies) so each packed row only sees its own
    # weights; biases are tiled p times along the lanes.
    w1p = block_diag(*([w1] * p)).astype(cdt)               # (p*F,  p*H1)
    w2p = block_diag(*([w2] * p)).astype(cdt)               # (p*H1, p*H2)
    w3p = block_diag(*([w3] * p)).astype(cdt)               # (p*H2, p)
    wzp = block_diag(*([wz] * p)).astype(cdt)               # (p*C,  p)
    b1p = jnp.tile(b1, (1, p))                              # (1, p*H1) f32
    b2p = jnp.tile(b2, (1, p))                              # (1, p*H2) f32

    # ---- Row-tile selection (padding-aware, generation-aware VMEM math). ---
    LANE = 128
    padl = lambda cols: _round_up(max(cols, 1), LANE)
    # Streamed / temporary VMEM bytes per packed row inside one grid step.
    bytes_per_prow = (
        2 * dt_bytes * padl(p * f)            # X tile, double-buffered
        + 2 * dt_bytes * padl(p * c)          # Z tile, double-buffered
        + 2 * 4 * padl(p)                     # output tile (f32), double-buf
        + 4 * (padl(p * h1) + padl(p * h2))   # h1 / h2 f32 temporaries
        + 2 * 4 * padl(p)                     # xb / zv f32 temporaries
    )
    # VMEM-resident (constant-index) operands; assume 2 buffers each.
    weights_bytes = 2 * (
        dt_bytes * (_round_up(p * f, 8) * padl(p * h1)
                    + _round_up(p * h1, 8) * padl(p * h2)
                    + _round_up(p * h2, 8) * padl(p)
                    + _round_up(p * c, 8) * padl(p))
        + 4 * 8 * (padl(p * h1) + padl(p * h2))
    )

    try:
        vmem_phys = pltpu.get_tpu_info().vmem_capacity_bytes
    except Exception:
        vmem_phys = 64 * 1024 * 1024          # most conservative (v7x-sized)
    # ~70% of physical, never more than 64 MiB: ~45 MiB on v7x (64 MiB phys),
    # 64 MiB on v5e/v6e (128 MiB phys).  Leaves compiler-scratch headroom.
    vmem_limit = max(min(int(0.70 * vmem_phys), 64 * 1024 * 1024),
                     32 * 1024 * 1024)
    tile_budget = max(min(vmem_limit - weights_bytes - (4 << 20), 48 << 20),
                      2 << 20)
    tm_r = max(8, tile_budget // bytes_per_prow)

    # Large batches: aim for >= 8 grid steps (>= ~4 per TensorCore on
    # dual-core chips) so prologue/epilogue DMAs hide behind compute, but do
    # not shrink below ~512 packed rows (per-step overhead ~0.35 us).
    MIN_PROWS = 512
    if n_prow > 8 * MIN_PROWS:
        tm_r = min(tm_r, _round_up(pl.cdiv(n_prow, 8), 8))
    if tm is not None:
        tm_r = min(tm_r, max(1, int(tm) // p))
    if tm_r >= n_prow:
        tm_r = n_prow                         # single step: block == full array
    else:
        tm_r = max(8, (tm_r // 8) * 8)        # multiple of 8; ragged last block
                                              # is clamped by Pallas (rows are
                                              # independent, so this is safe).

    grid = (pl.cdiv(n_prow, tm_r),)

    def row_tile(cols):
        return pl.BlockSpec((tm_r, cols), lambda i: (i, 0))

    def resident(shape):
        # Constant block index -> fetched once, stays VMEM-resident.
        return pl.BlockSpec(shape, lambda i: (0, 0))

    out = pl.pallas_call(
        countnet_kernel,
        out_shape=jax.ShapeDtypeStruct((n_prow, p), jnp.float32),
        grid_spec=pltpu.PrefetchScalarGridSpec(
            num_scalar_prefetch=0,
            grid=grid,
            in_specs=[
                row_tile(p * f),                      # X' (streamed)
                row_tile(p * c),                      # Z' (streamed)
                resident((p * f, p * h1)),            # W1'
                resident((1, p * h1)),                # b1'
                resident((p * h1, p * h2)),           # W2'
                resident((1, p * h2)),                # b2'
                resident((p * h2, p)),                # W3'
                resident((p * c, p)),                 # Wz'
                pl.BlockSpec(memory_space=pltpu.MemorySpace.SMEM),  # b3 scalar
            ],
            out_specs=row_tile(p),
        ),
        compiler_params=pltpu.CompilerParams(
            dimension_semantics=("parallel",),
            vmem_limit_bytes=vmem_limit,
        ),
    )(xp, zp, w1p, b1p, w2p, b2p, w3p, wzp, b3)

    # (N/p, p) -> (N, 1): free reshape; drop the padded rows if any.
    return out.reshape(n_pad, 1)[:n]


def reference_forward(x, z, params):
    """Pure-JAX reference of the same forward pass."""
    h = jnp.maximum(x @ params["w1"] + params["b1"].reshape(1, -1), 0.0)
    h = jnp.maximum(h @ params["w2"] + params["b2"].reshape(1, -1), 0.0)
    xb = h @ params["w3"] + params["b3"].reshape(1, 1)
    zv = z @ params["wz"]
    return jnp.exp(xb) * jnp.exp(zv)


if __name__ == "__main__":
    # Shapes consistent with the module: n_features=32, num_nodes=[32, 32],
    # n_clusters=16, batch N=256.
    N, F, H1, H2, C = 256, 32, 32, 32, 16

    key = jax.random.PRNGKey(0)
    keys = jax.random.split(key, 9)
    params = {
        "w1": 0.1 * jax.random.normal(keys[0], (F, H1), jnp.float32),
        "b1": 0.1 * jax.random.normal(keys[1], (1, H1), jnp.float32),
        "w2": 0.1 * jax.random.normal(keys[2], (H1, H2), jnp.float32),
        "b2": 0.1 * jax.random.normal(keys[3], (1, H2), jnp.float32),
        "w3": 0.1 * jax.random.normal(keys[4], (H2, 1), jnp.float32),
        "b3": 0.1 * jax.random.normal(keys[5], (1, 1), jnp.float32),
        "wz": 0.1 * jax.random.normal(keys[6], (C, 1), jnp.float32),
    }
    x = jax.random.normal(keys[7], (N, F), jnp.float32)
    # Z is a cluster-membership design matrix; use one-hot rows.
    cluster_ids = jax.random.randint(keys[8], (N,), 0, C)
    z = jax.nn.one_hot(cluster_ids, C, dtype=jnp.float32)

    ref = reference_forward(x, z, params)

    # 1) Default path: single tile covering the whole (small) batch.
    out = jax.block_until_ready(countnet_forward(x, z, params))
    np.testing.assert_allclose(np.asarray(out), np.asarray(ref),
                               rtol=1e-5, atol=1e-5)

    # 2) Multi-step streaming path with VMEM-resident weights (4 grid steps).
    out2 = jax.block_until_ready(countnet_forward(x, z, params, tm=64))
    np.testing.assert_allclose(np.asarray(out2), np.asarray(ref),
                               rtol=1e-5, atol=1e-5)

    # 3) Batch not a multiple of the pack factor + ragged last grid block.
    xr, zr = x[:131], z[:131]
    out3 = jax.block_until_ready(countnet_forward(xr, zr, params, tm=64))
    np.testing.assert_allclose(np.asarray(out3), np.asarray(ref[:131]),
                               rtol=1e-5, atol=1e-5)

    # 4) bf16-streamed variant (halves HBM bytes/row); looser tolerance.
    out4 = jax.block_until_ready(
        countnet_forward(x, z, params, compute_dtype=jnp.bfloat16))
    np.testing.assert_allclose(np.asarray(out4), np.asarray(ref),
                               rtol=3e-2, atol=3e-2)

    print("KERNEL_OK")
</pallas_src>

<mosaic_0001>
module attributes {stable_mosaic.version = 11 : i64} {
  func.func @countnet_kernel(%arg0: i32, %arg1: memref<32x256xf32, #tpu.memory_space<vmem>>, %arg2: memref<32x128xf32, #tpu.memory_space<vmem>>, %arg3: memref<256x256xf32, #tpu.memory_space<vmem>>, %arg4: memref<1x256xf32, #tpu.memory_space<vmem>>, %arg5: memref<256x256xf32, #tpu.memory_space<vmem>>, %arg6: memref<1x256xf32, #tpu.memory_space<vmem>>, %arg7: memref<256x8xf32, #tpu.memory_space<vmem>>, %arg8: memref<128x8xf32, #tpu.memory_space<vmem>>, %arg9: memref<1xf32, #tpu.memory_space<smem>>, %arg10: memref<32x8xf32, #tpu.memory_space<vmem>>) attributes {dimension_semantics = [#tpu.dimension_semantics<parallel>], iteration_bounds = array<i64: 1>, scalar_prefetch = 0 : i64, scratch_operands = 0 : i64, tpu.core_type = #tpu.core_type<tc>, window_params = [{transform_indices = @transform_0, window_bounds = array<i64: 32, 256>}, {transform_indices = @transform_1, window_bounds = array<i64: 32, 128>}, {pipeline_mode = #tpu.pipeline_mode<synchronous>, transform_indices = @transform_2, window_bounds = array<i64: 256, 256>}, {pipeline_mode = #tpu.pipeline_mode<synchronous>, transform_indices = @transform_3, window_bounds = array<i64: 1, 256>}, {pipeline_mode = #tpu.pipeline_mode<synchronous>, transform_indices = @transform_4, window_bounds = array<i64: 256, 256>}, {pipeline_mode = #tpu.pipeline_mode<synchronous>, transform_indices = @transform_5, window_bounds = array<i64: 1, 256>}, {pipeline_mode = #tpu.pipeline_mode<synchronous>, transform_indices = @transform_6, window_bounds = array<i64: 256, 8>}, {pipeline_mode = #tpu.pipeline_mode<synchronous>, transform_indices = @transform_7, window_bounds = array<i64: 128, 8>}, {transform_indices = @transform_8, window_bounds = array<i64: 1>}, {transform_indices = @transform_9, window_bounds = array<i64: 32, 8>}]} {
    %c0 = arith.constant 0 : index
    %c0_0 = arith.constant 0 : index
    %0 = vector.load %arg1[%c0, %c0_0] : memref<32x256xf32, #tpu.memory_space<vmem>>, vector<32x256xf32>
    %c0_1 = arith.constant 0 : index
    %c0_2 = arith.constant 0 : index
    %1 = vector.load %arg3[%c0_1, %c0_2] : memref<256x256xf32, #tpu.memory_space<vmem>>, vector<256x256xf32>
    %cst = arith.constant dense<0.000000e+00> : vector<32x256xf32>
    %2 = tpu.matmul %0, %1, %cst {dimension_numbers = #tpu.dot_dimension_numbers<[1], [0], [0], [1], [0, 0, 1, 1], [], []>} : vector<32x256xf32>, vector<256x256xf32>, vector<32x256xf32> -> vector<32x256xf32>
    %c0_3 = arith.constant 0 : index
    %c0_4 = arith.constant 0 : index
    %3 = vector.load %arg4[%c0_3, %c0_4] : memref<1x256xf32, #tpu.memory_space<vmem>>, vector<1x256xf32>
    %4 = vector.broadcast %3 : vector<1x256xf32> to vector<32x256xf32>
    %5 = arith.addf %2, %4 : vector<32x256xf32>
    %cst_5 = arith.constant 0.000000e+00 : f32
    %6 = vector.broadcast %cst_5 : f32 to vector<32x256xf32>
    %7 = arith.maximumf %5, %6 : vector<32x256xf32>
    %c0_6 = arith.constant 0 : index
    %c0_7 = arith.constant 0 : index
    %8 = vector.load %arg5[%c0_6, %c0_7] : memref<256x256xf32, #tpu.memory_space<vmem>>, vector<256x256xf32>
    %cst_8 = arith.constant dense<0.000000e+00> : vector<32x256xf32>
    %9 = tpu.matmul %7, %8, %cst_8 {dimension_numbers = #tpu.dot_dimension_numbers<[1], [0], [0], [1], [0, 0, 1, 1], [], []>} : vector<32x256xf32>, vector<256x256xf32>, vector<32x256xf32> -> vector<32x256xf32>
    %c0_9 = arith.constant 0 : index
    %c0_10 = arith.constant 0 : index
    %10 = vector.load %arg6[%c0_9, %c0_10] : memref<1x256xf32, #tpu.memory_space<vmem>>, vector<1x256xf32>
    %11 = vector.broadcast %10 : vector<1x256xf32> to vector<32x256xf32>
    %12 = arith.addf %9, %11 : vector<32x256xf32>
    %cst_11 = arith.constant 0.000000e+00 : f32
    %13 = vector.broadcast %cst_11 : f32 to vector<32x256xf32>
    %14 = arith.maximumf %12, %13 : vector<32x256xf32>
    %c0_12 = arith.constant 0 : index
    %c0_13 = arith.constant 0 : index
    %15 = vector.load %arg7[%c0_12, %c0_13] : memref<256x8xf32, #tpu.memory_space<vmem>>, vector<256x8xf32>
    %cst_14 = arith.constant dense<0.000000e+00> : vector<32x8xf32>
    %16 = tpu.matmul %14, %15, %cst_14 {dimension_numbers = #tpu.dot_dimension_numbers<[1], [0], [0], [1], [0, 0, 1, 1], [], []>} : vector<32x256xf32>, vector<256x8xf32>, vector<32x8xf32> -> vector<32x8xf32>
    %c0_15 = arith.constant 0 : index
    %c0_16 = arith.constant 0 : index
    %17 = vector.load %arg2[%c0_15, %c0_16] : memref<32x128xf32, #tpu.memory_space<vmem>>, vector<32x128xf32>
    %c0_17 = arith.constant 0 : index
    %c0_18 = arith.constant 0 : index
    %18 = vector.load %arg8[%c0_17, %c0_18] : memref<128x8xf32, #tpu.memory_space<vmem>>, vector<128x8xf32>
    %cst_19 = arith.constant dense<0.000000e+00> : vector<32x8xf32>
    %19 = tpu.matmul %17, %18, %cst_19 {dimension_numbers = #tpu.dot_dimension_numbers<[1], [0], [0], [1], [0, 0, 1, 1], [], []>} : vector<32x128xf32>, vector<128x8xf32>, vector<32x8xf32> -> vector<32x8xf32>
    %20 = arith.addf %16, %19 : vector<32x8xf32>
    %c0_20 = arith.constant 0 : index
    %21 = memref.load %arg9[%c0_20] : memref<1xf32, #tpu.memory_space<smem>>
    %22 = vector.broadcast %21 : f32 to vector<32x8xf32>
    %23 = arith.addf %20, %22 : vector<32x8xf32>
    %24 = math.exp %23 : vector<32x8xf32>
    %c0_21 = arith.constant 0 : index
    %c0_22 = arith.constant 0 : index
    %25 = vector.load %arg10[%c0_21, %c0_22] : memref<32x8xf32, #tpu.memory_space<vmem>>, vector<32x8xf32>
    tpu.vector_store %arg10[%c0_21, %c0_22], %24 {strides = array<i32>} : memref<32x8xf32, #tpu.memory_space<vmem>>, vector<32x8xf32>,
    return
  }
  func.func @transform_0(%arg0: i32) -> (i32, i32) {
    %c0_i32 = arith.constant 0 : i32
    %c0_i32_0 = arith.constant 0 : i32
    return %arg0, %c0_i32 : i32, i32
  }
  func.func @transform_1(%arg0: i32) -> (i32, i32) {
    %c0_i32 = arith.constant 0 : i32
    %c0_i32_0 = arith.constant 0 : i32
    return %arg0, %c0_i32 : i32, i32
  }
  func.func @transform_2(%arg0: i32) -> (i32, i32) {
    %c0_i32 = arith.constant 0 : i32
    %c0_i32_0 = arith.constant 0 : i32
    %c0_i32_1 = arith.constant 0 : i32
    return %c0_i32, %c0_i32_0 : i32, i32
  }
  func.func @transform_3(%arg0: i32) -> (i32, i32) {
    %c0_i32 = arith.constant 0 : i32
    %c0_i32_0 = arith.constant 0 : i32
    %c0_i32_1 = arith.constant 0 : i32
    return %c0_i32, %c0_i32_0 : i32, i32
  }
  func.func @transform_4(%arg0: i32) -> (i32, i32) {
    %c0_i32 = arith.constant 0 : i32
    %c0_i32_0 = arith.constant 0 : i32
    %c0_i32_1 = arith.constant 0 : i32
    return %c0_i32, %c0_i32_0 : i32, i32
  }
  func.func @transform_5(%arg0: i32) -> (i32, i32) {
    %c0_i32 = arith.constant 0 : i32
    %c0_i32_0 = arith.constant 0 : i32
    %c0_i32_1 = arith.constant 0 : i32
    return %c0_i32, %c0_i32_0 : i32, i32
  }
  func.func @transform_6(%arg0: i32) -> (i32, i32) {
    %c0_i32 = arith.constant 0 : i32
    %c0_i32_0 = arith.constant 0 : i32
    %c0_i32_1 = arith.constant 0 : i32
    return %c0_i32, %c0_i32_0 : i32, i32
  }
  func.func @transform_7(%arg0: i32) -> (i32, i32) {
    %c0_i32 = arith.constant 0 : i32
    %c0_i32_0 = arith.constant 0 : i32
    %c0_i32_1 = arith.constant 0 : i32
    return %c0_i32, %c0_i32_0 : i32, i32
  }
  func.func @transform_8(%arg0: i32) -> i32 {
    %c0_i32 = arith.constant 0 : i32
    %c0_i32_0 = arith.constant 0 : i32
    return %c0_i32 : i32
  }
  func.func @transform_9(%arg0: i32) -> (i32, i32) {
    %c0_i32 = arith.constant 0 : i32
    %c0_i32_0 = arith.constant 0 : i32
    return %arg0, %c0_i32 : i32, i32
  }
}

</mosaic_0001>

<llo_original>
// kernel: tpu_custom_call.1
$region0: #{tpu_custom_call.1}
  #allocation0 [shape = 'u32[]', space=smem, size = 0x4, offset = 0x4, fixed_abs, tag = 'smem constant byte address 0x4 - core index']
  #allocation1 [shape = 'u32[144,128]{1,0:T(1,128)}', space=vmem, size = 0x12000, scoped, tag = 'internal scratch']
  #allocation2 [shape = 'f32[1]{0:T(128)S(6)}', space=smem, size = 0x200, scoped, tag = 'scoped memory for tpu_custom_call.1']
  %s0 = inlined_call_operand.vmem [shape: f32[32,256], index: 0, kind: input, shape index: {}]
  %s1 = inlined_call_operand.vmem [shape: f32[32,128], index: 1, kind: input, shape index: {}]
  %s2 = inlined_call_operand.hbm [shape: f32[256,256], index: 2, kind: input, shape index: {}]
  %s3 = inlined_call_operand.vmem [shape: f32[1,256], index: 3, kind: input, shape index: {}]
  %s4 = inlined_call_operand.hbm [shape: f32[256,256], index: 4, kind: input, shape index: {}]
  %s5 = inlined_call_operand.vmem [shape: f32[1,256], index: 5, kind: input, shape index: {}]
  %s6 = inlined_call_operand.vmem [shape: f32[256,8], index: 6, kind: input, shape index: {}]
  %s7 = inlined_call_operand.vmem [shape: f32[128,8], index: 7, kind: input, shape index: {}]
  %s8 = inlined_call_operand.<no memory space> [shape: f32[1], index: 8, kind: input, shape index: {}]
  %s9 = inlined_call_operand.vmem [shape: f32[32,8], index: 9, kind: output, shape index: {}]
  %s10 = sld [smem:[#allocation0]]
  $region54: #{tpu_custom_call.1} parent=0
    _
  %s12 = ssub.s32 1, %s10
  %s13 = scalar_select 0, %s12, %s10
  %14 = sst [smem:[#allocation2]] %s8
  $region1: #{tpu_custom_call.1} parent=0
    #allocation3 [shape = 'u8[262144]{0}', space=vmem, size = 0x40000, scoped, tag = 'input window, operand 2, single buffered']
    #allocation4 [shape = 's32[1]{0}', space=sflag, size = 0x4, scoped, tag = 'scoped memory for tpu_custom_call.1']
    #allocation5 [shape = 'u8[262144]{0}', space=vmem, size = 0x40000, scoped, tag = 'input window, operand 4, single buffered']
    #allocation6 [shape = 's32[1]{0}', space=sflag, size = 0x4, scoped, tag = 'scoped memory for tpu_custom_call.1']
    %15 = vsyncpa [#allocation4], 0
    %16 = vsyncpa [#allocation6], 0
    // Predicated region
    $region2: #{tpu_custom_call.1} parent=1 // pred_check
      _
    $region3: #{tpu_custom_call.1} parent=1 // pred_check_branch
      %18 = sbr.rel (0) target = $region5
    $region4: #{tpu_custom_call.1} parent=1 // pred_region
      _
    $region5: #{tpu_custom_call.1} parent=1 // pred_fallthru
      _
    // Predicated region
    $region6: #{tpu_custom_call.1} parent=1 // pred_check
      _
    $region7: #{tpu_custom_call.1} parent=1 // pred_check_branch
      %20 = sbr.rel (0) target = $region9
    $region8: #{tpu_custom_call.1} parent=1 // pred_region
      _
    $region9: #{tpu_custom_call.1} parent=1 // pred_fallthru
      _
    // Predicated region
    $region10: #{tpu_custom_call.1} parent=1 // pred_check
      _
    $region11: #{tpu_custom_call.1} parent=1 // pred_check_branch
      %22 = sbr.rel (0) target = $region13
    $region12: #{tpu_custom_call.1} parent=1 // pred_region
      %s24 = ssub.s32 8192, 8192
      %25 = vsyncadd [#allocation4], %s24
      %s26 = sshll.u32 [#allocation3], 4
      %s27 = int_to_ptr.vmem [resolvable:$true] %s26
      %32 = dma.hbm_to_vmem [thread:$0]  %s2, 8192, %s27, [#allocation4], 256, 256, 16
    $region13: #{tpu_custom_call.1} parent=1 // pred_fallthru
      _
    // Predicated region
    $region14: #{tpu_custom_call.1} parent=1 // pred_check
      _
    $region15: #{tpu_custom_call.1} parent=1 // pred_check_branch
      %34 = sbr.rel (0) target = $region17
    $region16: #{tpu_custom_call.1} parent=1 // pred_region
      _
    $region17: #{tpu_custom_call.1} parent=1 // pred_fallthru
      _
    // Predicated region
    $region18: #{tpu_custom_call.1} parent=1 // pred_check
      _
    $region19: #{tpu_custom_call.1} parent=1 // pred_check_branch
      %36 = sbr.rel (0) target = $region21
    $region20: #{tpu_custom_call.1} parent=1 // pred_region
      %s38 = ssub.s32 8192, 8192
      %39 = vsyncadd [#allocation6], %s38
      %s40 = sshll.u32 [#allocation5], 4
      %s41 = int_to_ptr.vmem [resolvable:$true] %s40
      %46 = dma.hbm_to_vmem [thread:$0]  %s4, 8192, %s41, [#allocation6], 256, 256, 16
    $region21: #{tpu_custom_call.1} parent=1 // pred_fallthru
      _
    // Predicated region
    $region22: #{tpu_custom_call.1} parent=1 // pred_check
      _
    $region23: #{tpu_custom_call.1} parent=1 // pred_check_branch
      %48 = sbr.rel (0) target = $region25
    $region24: #{tpu_custom_call.1} parent=1 // pred_region
      _
    $region25: #{tpu_custom_call.1} parent=1 // pred_fallthru
      _
    // Predicated region
    $region26: #{tpu_custom_call.1} parent=1 // pred_check
      _
    $region27: #{tpu_custom_call.1} parent=1 // pred_check_branch
      %50 = sbr.rel (0) target = $region29
    $region28: #{tpu_custom_call.1} parent=1 // pred_region
      _
    $region29: #{tpu_custom_call.1} parent=1 // pred_fallthru
      _
    // Predicated region
    $region30: #{tpu_custom_call.1} parent=1 // pred_check
      _
    $region31: #{tpu_custom_call.1} parent=1 // pred_check_branch
      %52 = sbr.rel (0) target = $region33
    $region32: #{tpu_custom_call.1} parent=1 // pred_region
      _
    $region33: #{tpu_custom_call.1} parent=1 // pred_fallthru
      _
    // Predicated region
    $region34: #{tpu_custom_call.1} parent=1 // pred_check
      _
    $region35: #{tpu_custom_call.1} parent=1 // pred_check_branch
      %54 = sbr.rel (0) target = $region37
    $region36: #{tpu_custom_call.1} parent=1 // pred_region
      _
    $region37: #{tpu_custom_call.1} parent=1 // pred_fallthru
      _
    // Predicated region
    $region38: #{tpu_custom_call.1} parent=1 // pred_check
      _
    $region39: #{tpu_custom_call.1} parent=1 // pred_check_branch
      %56 = sbr.rel (0) target = $region41
    $region40: #{tpu_custom_call.1} parent=1 // pred_region
      %57 = dma.done [#allocation4], 8192
    $region41: #{tpu_custom_call.1} parent=1 // pred_fallthru
      _
    // Predicated region
    $region42: #{tpu_custom_call.1} parent=1 // pred_check
      _
    $region43: #{tpu_custom_call.1} parent=1 // pred_check_branch
      %59 = sbr.rel (0) target = $region45
    $region44: #{tpu_custom_call.1} parent=1 // pred_region
      %60 = dma.done [#allocation6], 8192
    $region45: #{tpu_custom_call.1} parent=1 // pred_fallthru
      _
    %v61 = vld [vmem:[%s0] sm:$0xff]
    %v62 = vld [vmem:[%s0 + $0x8] sm:$0xff]
    %v63 = vld [vmem:[%s0 + $0x10] sm:$0xff]
    %v64 = vld [vmem:[%s0 + $0x18] sm:$0xff]
    %v65 = vld [vmem:[%s0 + $0x20] sm:$0xff]
    %v66 = vld [vmem:[%s0 + $0x28] sm:$0xff]
    %v67 = vld [vmem:[%s0 + $0x30] sm:$0xff]
    %v68 = vld [vmem:[%s0 + $0x38] sm:$0xff]
    %v69 = vld [vmem:[#allocation3] sm:$0xff]
    %v70 = vld [vmem:[#allocation3 + $0x8] sm:$0xff]
    %v71 = vld [vmem:[#allocation3 + $0x10] sm:$0xff]
    %v72 = vld [vmem:[#allocation3 + $0x18] sm:$0xff]
    %v73 = vld [vmem:[#allocation3 + $0x20] sm:$0xff]
    %v74 = vld [vmem:[#allocation3 + $0x28] sm:$0xff]
    %v75 = vld [vmem:[#allocation3 + $0x30] sm:$0xff]
    %v76 = vld [vmem:[#allocation3 + $0x38] sm:$0xff]
    %v77 = vld [vmem:[#allocation3 + $0x40] sm:$0xff]
    %v78 = vld [vmem:[#allocation3 + $0x48] sm:$0xff]
    %v79 = vld [vmem:[#allocation3 + $0x50] sm:$0xff]
    %v80 = vld [vmem:[#allocation3 + $0x58] sm:$0xff]
    %v81 = vld [vmem:[#allocation3 + $0x60] sm:$0xff]
    %v82 = vld [vmem:[#allocation3 + $0x68] sm:$0xff]
    %v83 = vld [vmem:[#allocation3 + $0x70] sm:$0xff]
    %v84 = vld [vmem:[#allocation3 + $0x78] sm:$0xff]
    %v85 = vld [vmem:[#allocation3 + $0x80] sm:$0xff]
    %v86 = vld [vmem:[#allocation3 + $0x88] sm:$0xff]
    %v87 = vld [vmem:[#allocation3 + $0x90] sm:$0xff]
    %v88 = vld [vmem:[#allocation3 + $0x98] sm:$0xff]
    %v89 = vld [vmem:[#allocation3 + $0xa0] sm:$0xff]
    %v90 = vld [vmem:[#allocation3 + $0xa8] sm:$0xff]
    %v91 = vld [vmem:[#allocation3 + $0xb0] sm:$0xff]
    %v92 = vld [vmem:[#allocation3 + $0xb8] sm:$0xff]
    %v93 = vld [vmem:[#allocation3 + $0xc0] sm:$0xff]
    %v94 = vld [vmem:[#allocation3 + $0xc8] sm:$0xff]
    %v95 = vld [vmem:[#allocation3 + $0xd0] sm:$0xff]
    %v96 = vld [vmem:[#allocation3 + $0xd8] sm:$0xff]
    %v97 = vld [vmem:[#allocation3 + $0xe0] sm:$0xff]
    %v98 = vld [vmem:[#allocation3 + $0xe8] sm:$0xff]
    %v99 = vld [vmem:[#allocation3 + $0xf0] sm:$0xff]
    %v100 = vld [vmem:[#allocation3 + $0xf8] sm:$0xff]
    %v101 = vld [vmem:[#allocation3 + $0x100] sm:$0xff]
    %v102 = vld [vmem:[#allocation3 + $0x108] sm:$0xff]
    %v103 = vld [vmem:[#allocation3 + $0x110] sm:$0xff]
    %v104 = vld [vmem:[#allocation3 + $0x118] sm:$0xff]
    %v105 = vld [vmem:[#allocation3 + $0x120] sm:$0xff]
    %v106 = vld [vmem:[#allocation3 + $0x128] sm:$0xff]
    %v107 = vld [vmem:[#allocation3 + $0x130] sm:$0xff]
    %v108 = vld [vmem:[#allocation3 + $0x138] sm:$0xff]
    %v109 = vld [vmem:[#allocation3 + $0x140] sm:$0xff]
    %v110 = vld [vmem:[#allocation3 + $0x148] sm:$0xff]
    %v111 = vld [vmem:[#allocation3 + $0x150] sm:$0xff]
    %v112 = vld [vmem:[#allocation3 + $0x158] sm:$0xff]
    %v113 = vld [vmem:[#allocation3 + $0x160] sm:$0xff]
    %v114 = vld [vmem:[#allocation3 + $0x168] sm:$0xff]
    %v115 = vld [vmem:[#allocation3 + $0x170] sm:$0xff]
    %v116 = vld [vmem:[#allocation3 + $0x178] sm:$0xff]
    %v117 = vld [vmem:[#allocation3 + $0x180] sm:$0xff]
    %v118 = vld [vmem:[#allocation3 + $0x188] sm:$0xff]
    %v119 = vld [vmem:[#allocation3 + $0x190] sm:$0xff]
    %v120 = vld [vmem:[#allocation3 + $0x198] sm:$0xff]
    %v121 = vld [vmem:[#allocation3 + $0x1a0] sm:$0xff]
    %v122 = vld [vmem:[#allocation3 + $0x1a8] sm:$0xff]
    %v123 = vld [vmem:[#allocation3 + $0x1b0] sm:$0xff]
    %v124 = vld [vmem:[#allocation3 + $0x1b8] sm:$0xff]
    %v125 = vld [vmem:[#allocation3 + $0x1c0] sm:$0xff]
    %v126 = vld [vmem:[#allocation3 + $0x1c8] sm:$0xff]
    %v127 = vld [vmem:[#allocation3 + $0x1d0] sm:$0xff]
    %v128 = vld [vmem:[#allocation3 + $0x1d8] sm:$0xff]
    %v129 = vld [vmem:[#allocation3 + $0x1e0] sm:$0xff]
    %v130 = vld [vmem:[#allocation3 + $0x1e8] sm:$0xff]
    %v131 = vld [vmem:[#allocation3 + $0x1f0] sm:$0xff]
    %v132 = vld [vmem:[#allocation3 + $0x1f8] sm:$0xff]
    %v133 = vld [vmem:[%s3] sm:$0x3]
    %v135 = vlaneseq
    %v136 = vshrl.u32 %v135, 7
    %v137 = vsub.s32 0, %v136
    %v138 = vrot.slane %v133, %v137
    %v139 = vlaneseq
    %v140 = vshrl.u32 %v139, 7
    %v141 = vsub.s32 1, %v140
    %v142 = vrot.slane %v133, %v141
    %145 = vmatprep.subr.mxu0 %v70
    %146 = vmatpush1.msra.mxu0 %v69
    %147 = vmatprep.subr.mxu0 %v72
    %148 = vmatpush1.msra.mxu0 %v71
    %149 = vmatprep.subr.mxu0 %v74
    %150 = vmatpush1.msra.mxu0 %v73
    %151 = vmatprep.subr.mxu0 %v76
    %152 = vmatpush1.msra.mxu0 %v75
    %153 = vmatprep.subr.mxu0 %v78
    %154 = vmatpush1.msra.mxu0 %v77
    %155 = vmatprep.subr.mxu0 %v80
    %156 = vmatpush1.msra.mxu0 %v79
    %157 = vmatprep.subr.mxu0 %v82
    %158 = vmatpush1.msra.mxu0 %v81
    %159 = vmatprep.subr.mxu0 %v84
    %160 = vmatpush1.msra.mxu0 %v83
    %161 = vmatprep.subr.mxu0 %v86
    %162 = vmatpush1.msra.mxu0 %v85
    %163 = vmatprep.subr.mxu0 %v88
    %164 = vmatpush1.msra.mxu0 %v87
    %165 = vmatprep.subr.mxu0 %v90
    %166 = vmatpush1.msra.mxu0 %v89
    %167 = vmatprep.subr.mxu0 %v92
    %168 = vmatpush1.msra.mxu0 %v91
    %169 = vmatprep.subr.mxu0 %v94
    %170 = vmatpush1.msra.mxu0 %v93
    %171 = vmatprep.subr.mxu0 %v96
    %172 = vmatpush1.msra.mxu0 %v95
    %173 = vmatprep.subr.mxu0 %v98
    %174 = vmatpush1.msra.mxu0 %v97
    %175 = vmatprep.subr.mxu0 %v100
    %176 = vmatpush1.msra.mxu0 %v99
    %177 = vmatprep.subr.mxu0 %v102
    %178 = vmatpush1.msra.mxu0 %v101
    %179 = vmatprep.subr.mxu0 %v104
    %180 = vmatpush1.msra.mxu0 %v103
    %181 = vmatprep.subr.mxu0 %v106
    %182 = vmatpush1.msra.mxu0 %v105
    %183 = vmatprep.subr.mxu0 %v108
    %184 = vmatpush1.msra.mxu0 %v107
    %185 = vmatprep.subr.mxu0 %v110
    %186 = vmatpush1.msra.mxu0 %v109
    %187 = vmatprep.subr.mxu0 %v112
    %188 = vmatpush1.msra.mxu0 %v111
    %189 = vmatprep.subr.mxu0 %v114
    %190 = vmatpush1.msra.mxu0 %v113
    %191 = vmatprep.subr.mxu0 %v116
    %192 = vmatpush1.msra.mxu0 %v115
    %193 = vmatprep.subr.mxu0 %v118
    %194 = vmatpush1.msra.mxu0 %v117
    %195 = vmatprep.subr.mxu0 %v120
    %196 = vmatpush1.msra.mxu0 %v119
    %197 = vmatprep.subr.mxu0 %v122
    %198 = vmatpush1.msra.mxu0 %v121
    %199 = vmatprep.subr.mxu0 %v124
    %200 = vmatpush1.msra.mxu0 %v123
    %201 = vmatprep.subr.mxu0 %v126
    %202 = vmatpush1.msra.mxu0 %v125
    %203 = vmatprep.subr.mxu0 %v128
    %204 = vmatpush1.msra.mxu0 %v127
    %205 = vmatprep.subr.mxu0 %v130
    %206 = vmatpush1.msra.mxu0 %v129
    %207 = vmatprep.subr.mxu0 %v132
    %208 = vmatpush1.msra.mxu0 %v131
    %209 = vmatprep.mubr.f32.mxu0 %v62
    %210 = vmatmul.mubr.f32.gmra.mrb[0].mxu0 %v61
    %v211 = vpop.f32.mrb[0].mxu0
    %v212 = vadd.f32 %v138, %v211
    %v213 = vpop.f32.mrb[0].mxu0
    %v214 = vadd.f32 %v142, %v213
    %215 = vmatprep.mubr.f32.mxu0 %v64
    %216 = vmatmul.mubr.f32.gmra.mrb[0].mxu0 %v63
    %v217 = vpop.f32.mrb[0].mxu0
    %v218 = vadd.f32 %v138, %v217
    %v219 = vpop.f32.mrb[0].mxu0
    %v220 = vadd.f32 %v142, %v219
    %221 = vmatprep.mubr.f32.mxu0 %v66
    %222 = vmatmul.mubr.f32.gmra.mrb[0].mxu0 %v65
    %v223 = vpop.f32.mrb[0].mxu0
    %v224 = vadd.f32 %v138, %v223
    %v225 = vpop.f32.mrb[0].mxu0
    %v226 = vadd.f32 %v142, %v225
    %227 = vmatprep.mubr.f32.mxu0 %v68
    %228 = vmatmul.mubr.f32.gmra.mrb[0].mxu0 %v67
    %v229 = vpop.f32.mrb[0].mxu0
    %v230 = vadd.f32 %v138, %v229
    %v231 = vpop.f32.mrb[0].mxu0
    %v232 = vadd.f32 %v142, %v231
    %233 = vdwg.mxu0
    %v234 = vmax.f32 %v212, 0.0
    %v235 = vmax.f32 %v214, 0.0
    %v236 = vmax.f32 %v218, 0.0
    %v237 = vmax.f32 %v220, 0.0
    %v238 = vmax.f32 %v224, 0.0
    %v239 = vmax.f32 %v226, 0.0
    %v240 = vmax.f32 %v230, 0.0
    %v241 = vmax.f32 %v232, 0.0
    %v242 = vld [vmem:[#allocation5] sm:$0xff]
    %v243 = vld [vmem:[#allocation5 + $0x8] sm:$0xff]
    %v244 = vld [vmem:[#allocation5 + $0x10] sm:$0xff]
    %v245 = vld [vmem:[#allocation5 + $0x18] sm:$0xff]
    %v246 = vld [vmem:[#allocation5 + $0x20] sm:$0xff]
    %v247 = vld [vmem:[#allocation5 + $0x28] sm:$0xff]
    %v248 = vld [vmem:[#allocation5 + $0x30] sm:$0xff]
    %v249 = vld [vmem:[#allocation5 + $0x38] sm:$0xff]
    %v250 = vld [vmem:[#allocation5 + $0x40] sm:$0xff]
    %v251 = vld [vmem:[#allocation5 + $0x48] sm:$0xff]
    %v252 = vld [vmem:[#allocation5 + $0x50] sm:$0xff]
    %v253 = vld [vmem:[#allocation5 + $0x58] sm:$0xff]
    %v254 = vld [vmem:[#allocation5 + $0x60] sm:$0xff]
    %v255 = vld [vmem:[#allocation5 + $0x68] sm:$0xff]
    %v256 = vld [vmem:[#allocation5 + $0x70] sm:$0xff]
    %v257 = vld [vmem:[#allocation5 + $0x78] sm:$0xff]
    %v258 = vld [vmem:[#allocation5 + $0x80] sm:$0xff]
    %v259 = vld [vmem:[#allocation5 + $0x88] sm:$0xff]
    %v260 = vld [vmem:[#allocation5 + $0x90] sm:$0xff]
    %v261 = vld [vmem:[#allocation5 + $0x98] sm:$0xff]
    %v262 = vld [vmem:[#allocation5 + $0xa0] sm:$0xff]
    %v263 = vld [vmem:[#allocation5 + $0xa8] sm:$0xff]
    %v264 = vld [vmem:[#allocation5 + $0xb0] sm:$0xff]
    %v265 = vld [vmem:[#allocation5 + $0xb8] sm:$0xff]
    %v266 = vld [vmem:[#allocation5 + $0xc0] sm:$0xff]
    %v267 = vld [vmem:[#allocation5 + $0xc8] sm:$0xff]
    %v268 = vld [vmem:[#allocation5 + $0xd0] sm:$0xff]
    %v269 = vld [vmem:[#allocation5 + $0xd8] sm:$0xff]
    %v270 = vld [vmem:[#allocation5 + $0xe0] sm:$0xff]
    %v271 = vld [vmem:[#allocation5 + $0xe8] sm:$0xff]
    %v272 = vld [vmem:[#allocation5 + $0xf0] sm:$0xff]
    %v273 = vld [vmem:[#allocation5 + $0xf8] sm:$0xff]
    %v274 = vld [vmem:[#allocation5 + $0x100] sm:$0xff]
    %v275 = vld [vmem:[#allocation5 + $0x108] sm:$0xff]
    %v276 = vld [vmem:[#allocation5 + $0x110] sm:$0xff]
    %v277 = vld [vmem:[#allocation5 + $0x118] sm:$0xff]
    %v278 = vld [vmem:[#allocation5 + $0x120] sm:$0xff]
    %v279 = vld [vmem:[#allocation5 + $0x128] sm:$0xff]
    %v280 = vld [vmem:[#allocation5 + $0x130] sm:$0xff]
    %v281 = vld [vmem:[#allocation5 + $0x138] sm:$0xff]
    %v282 = vld [vmem:[#allocation5 + $0x140] sm:$0xff]
    %v283 = vld [vmem:[#allocation5 + $0x148] sm:$0xff]
    %v284 = vld [vmem:[#allocation5 + $0x150] sm:$0xff]
    %v285 = vld [vmem:[#allocation5 + $0x158] sm:$0xff]
    %v286 = vld [vmem:[#allocation5 + $0x160] sm:$0xff]
    %v287 = vld [vmem:[#allocation5 + $0x168] sm:$0xff]
    %v288 = vld [vmem:[#allocation5 + $0x170] sm:$0xff]
    %v289 = vld [vmem:[#allocation5 + $0x178] sm:$0xff]
    %v290 = vld [vmem:[#allocation5 + $0x180] sm:$0xff]
    %v291 = vld [vmem:[#allocation5 + $0x188] sm:$0xff]
    %v292 = vld [vmem:[#allocation5 + $0x190] sm:$0xff]
    %v293 = vld [vmem:[#allocation5 + $0x198] sm:$0xff]
    %v294 = vld [vmem:[#allocation5 + $0x1a0] sm:$0xff]
    %v295 = vld [vmem:[#allocation5 + $0x1a8] sm:$0xff]
    %v296 = vld [vmem:[#allocation5 + $0x1b0] sm:$0xff]
    %v297 = vld [vmem:[#allocation5 + $0x1b8] sm:$0xff]
    %v298 = vld [vmem:[#allocation5 + $0x1c0] sm:$0xff]
    %v299 = vld [vmem:[#allocation5 + $0x1c8] sm:$0xff]
    %v300 = vld [vmem:[#allocation5 + $0x1d0] sm:$0xff]
    %v301 = vld [vmem:[#allocation5 + $0x1d8] sm:$0xff]
    %v302 = vld [vmem:[#allocation5 + $0x1e0] sm:$0xff]
    %v303 = vld [vmem:[#allocation5 + $0x1e8] sm:$0xff]
    %v304 = vld [vmem:[#allocation5 + $0x1f0] sm:$0xff]
    %v305 = vld [vmem:[#allocation5 + $0x1f8] sm:$0xff]
    %v306 = vld [vmem:[%s5] sm:$0x3]
    %v308 = vlaneseq
    %v309 = vshrl.u32 %v308, 7
    %v310 = vsub.s32 0, %v309
    %v311 = vrot.slane %v306, %v310
    %v312 = vlaneseq
    %v313 = vshrl.u32 %v312, 7
    %v314 = vsub.s32 1, %v313
    %v315 = vrot.slane %v306, %v314
    %318 = vmatprep.subr.mxu0 %v243
    %319 = vmatpush1.msra.mxu0 %v242
    %320 = vmatprep.subr.mxu0 %v245
    %321 = vmatpush1.msra.mxu0 %v244
    %322 = vmatprep.subr.mxu0 %v247
    %323 = vmatpush1.msra.mxu0 %v246
    %324 = vmatprep.subr.mxu0 %v249
    %325 = vmatpush1.msra.mxu0 %v248
    %326 = vmatprep.subr.mxu0 %v251
    %327 = vmatpush1.msra.mxu0 %v250
    %328 = vmatprep.subr.mxu0 %v253
    %329 = vmatpush1.msra.mxu0 %v252
    %330 = vmatprep.subr.mxu0 %v255
    %331 = vmatpush1.msra.mxu0 %v254
    %332 = vmatprep.subr.mxu0 %v257
    %333 = vmatpush1.msra.mxu0 %v256
    %334 = vmatprep.subr.mxu0 %v259
    %335 = vmatpush1.msra.mxu0 %v258
    %336 = vmatprep.subr.mxu0 %v261
    %337 = vmatpush1.msra.mxu0 %v260
    %338 = vmatprep.subr.mxu0 %v263
    %339 = vmatpush1.msra.mxu0 %v262
    %340 = vmatprep.subr.mxu0 %v265
    %341 = vmatpush1.msra.mxu0 %v264
    %342 = vmatprep.subr.mxu0 %v267
    %343 = vmatpush1.msra.mxu0 %v266
    %344 = vmatprep.subr.mxu0 %v269
    %345 = vmatpush1.msra.mxu0 %v268
    %346 = vmatprep.subr.mxu0 %v271
    %347 = vmatpush1.msra.mxu0 %v270
    %348 = vmatprep.subr.mxu0 %v273
    %349 = vmatpush1.msra.mxu0 %v272
    %350 = vmatprep.subr.mxu0 %v275
    %351 = vmatpush1.msra.mxu0 %v274
    %352 = vmatprep.subr.mxu0 %v277
    %353 = vmatpush1.msra.mxu0 %v276
    %354 = vmatprep.subr.mxu0 %v279
    %355 = vmatpush1.msra.mxu0 %v278
    %356 = vmatprep.subr.mxu0 %v281
    %357 = vmatpush1.msra.mxu0 %v280
    %358 = vmatprep.subr.mxu0 %v283
    %359 = vmatpush1.msra.mxu0 %v282
    %360 = vmatprep.subr.mxu0 %v285
    %361 = vmatpush1.msra.mxu0 %v284
    %362 = vmatprep.subr.mxu0 %v287
    %363 = vmatpush1.msra.mxu0 %v286
    %364 = vmatprep.subr.mxu0 %v289
    %365 = vmatpush1.msra.mxu0 %v288
    %366 = vmatprep.subr.mxu0 %v291
    %367 = vmatpush1.msra.mxu0 %v290
    %368 = vmatprep.subr.mxu0 %v293
    %369 = vmatpush1.msra.mxu0 %v292
    %370 = vmatprep.subr.mxu0 %v295
    %371 = vmatpush1.msra.mxu0 %v294
    %372 = vmatprep.subr.mxu0 %v297
    %373 = vmatpush1.msra.mxu0 %v296
    %374 = vmatprep.subr.mxu0 %v299
    %375 = vmatpush1.msra.mxu0 %v298
    %376 = vmatprep.subr.mxu0 %v301
    %377 = vmatpush1.msra.mxu0 %v300
    %378 = vmatprep.subr.mxu0 %v303
    %379 = vmatpush1.msra.mxu0 %v302
    %380 = vmatprep.subr.mxu0 %v305
    %381 = vmatpush1.msra.mxu0 %v304
    %382 = vmatprep.mubr.f32.mxu0 %v235
    %383 = vmatmul.mubr.f32.gmra.mrb[0].mxu0 %v234
    %v384 = vpop.f32.mrb[0].mxu0
    %v385 = vadd.f32 %v311, %v384
    %v386 = vpop.f32.mrb[0].mxu0
    %v387 = vadd.f32 %v315, %v386
    %388 = vmatprep.mubr.f32.mxu0 %v237
    %389 = vmatmul.mubr.f32.gmra.mrb[0].mxu0 %v236
    %v390 = vpop.f32.mrb[0].mxu0
    %v391 = vadd.f32 %v311, %v390
    %v392 = vpop.f32.mrb[0].mxu0
    %v393 = vadd.f32 %v315, %v392
    %394 = vmatprep.mubr.f32.mxu0 %v239
    %395 = vmatmul.mubr.f32.gmra.mrb[0].mxu0 %v238
    %v396 = vpop.f32.mrb[0].mxu0
    %v397 = vadd.f32 %v311, %v396
    %v398 = vpop.f32.mrb[0].mxu0
    %v399 = vadd.f32 %v315, %v398
    %400 = vmatprep.mubr.f32.mxu0 %v241
    %401 = vmatmul.mubr.f32.gmra.mrb[0].mxu0 %v240
    %v402 = vpop.f32.mrb[0].mxu0
    %v403 = vadd.f32 %v311, %v402
    %v404 = vpop.f32.mrb[0].mxu0
    %v405 = vadd.f32 %v315, %v404
    %406 = vdwg.mxu0
    %v407 = vmax.f32 %v385, 0.0
    %v408 = vmax.f32 %v387, 0.0
    %v409 = vmax.f32 %v391, 0.0
    %v410 = vmax.f32 %v393, 0.0
    %v411 = vmax.f32 %v397, 0.0
    %v412 = vmax.f32 %v399, 0.0
    %v413 = vmax.f32 %v403, 0.0
    %v414 = vmax.f32 %v405, 0.0
    %v415 = vld [vmem:[%s6] sm:$0xff]
    %v416 = vld [vmem:[%s6 + $0x8] sm:$0xff]
    %v417 = vld [vmem:[%s6 + $0x10] sm:$0xff]
    %v418 = vld [vmem:[%s6 + $0x18] sm:$0xff]
    %v419 = vld [vmem:[%s6 + $0x20] sm:$0xff]
    %v420 = vld [vmem:[%s6 + $0x28] sm:$0xff]
    %v421 = vld [vmem:[%s6 + $0x30] sm:$0xff]
    %v422 = vld [vmem:[%s6 + $0x38] sm:$0xff]
    %v423 = vld [vmem:[%s6 + $0x40] sm:$0xff]
    %v424 = vld [vmem:[%s6 + $0x48] sm:$0xff]
    %v425 = vld [vmem:[%s6 + $0x50] sm:$0xff]
    %v426 = vld [vmem:[%s6 + $0x58] sm:$0xff]
    %v427 = vld [vmem:[%s6 + $0x60] sm:$0xff]
    %v428 = vld [vmem:[%s6 + $0x68] sm:$0xff]
    %v429 = vld [vmem:[%s6 + $0x70] sm:$0xff]
    %v430 = vld [vmem:[%s6 + $0x78] sm:$0xff]
    %v431 = vld [vmem:[%s6 + $0x80] sm:$0xff]
    %v432 = vld [vmem:[%s6 + $0x88] sm:$0xff]
    %v433 = vld [vmem:[%s6 + $0x90] sm:$0xff]
    %v434 = vld [vmem:[%s6 + $0x98] sm:$0xff]
    %v435 = vld [vmem:[%s6 + $0xa0] sm:$0xff]
    %v436 = vld [vmem:[%s6 + $0xa8] sm:$0xff]
    %v437 = vld [vmem:[%s6 + $0xb0] sm:$0xff]
    %v438 = vld [vmem:[%s6 + $0xb8] sm:$0xff]
    %v439 = vld [vmem:[%s6 + $0xc0] sm:$0xff]
    %v440 = vld [vmem:[%s6 + $0xc8] sm:$0xff]
    %v441 = vld [vmem:[%s6 + $0xd0] sm:$0xff]
    %v442 = vld [vmem:[%s6 + $0xd8] sm:$0xff]
    %v443 = vld [vmem:[%s6 + $0xe0] sm:$0xff]
    %v444 = vld [vmem:[%s6 + $0xe8] sm:$0xff]
    %v445 = vld [vmem:[%s6 + $0xf0] sm:$0xff]
    %v446 = vld [vmem:[%s6 + $0xf8] sm:$0xff]
    %v447 = vld [vmem:[%s1] sm:$0xff]
    %v448 = vld [vmem:[%s1 + $0x8] sm:$0xff]
    %v449 = vld [vmem:[%s1 + $0x10] sm:$0xff]
    %v450 = vld [vmem:[%s1 + $0x18] sm:$0xff]
    %v451 = vld [vmem:[%s7] sm:$0xff]
    %v452 = vld [vmem:[%s7 + $0x8] sm:$0xff]
    %v453 = vld [vmem:[%s7 + $0x10] sm:$0xff]
    %v454 = vld [vmem:[%s7 + $0x18] sm:$0xff]
    %v455 = vld [vmem:[%s7 + $0x20] sm:$0xff]
    %v456 = vld [vmem:[%s7 + $0x28] sm:$0xff]
    %v457 = vld [vmem:[%s7 + $0x30] sm:$0xff]
    %v458 = vld [vmem:[%s7 + $0x38] sm:$0xff]
    %v459 = vld [vmem:[%s7 + $0x40] sm:$0xff]
    %v460 = vld [vmem:[%s7 + $0x48] sm:$0xff]
    %v461 = vld [vmem:[%s7 + $0x50] sm:$0xff]
    %v462 = vld [vmem:[%s7 + $0x58] sm:$0xff]
    %v463 = vld [vmem:[%s7 + $0x60] sm:$0xff]
    %v464 = vld [vmem:[%s7 + $0x68] sm:$0xff]
    %v465 = vld [vmem:[%s7 + $0x70] sm:$0xff]
    %v466 = vld [vmem:[%s7 + $0x78] sm:$0xff]
    %467 = vmatprep.subr.mxu0 0.0
    %468 = vmatpush1.msra.mxu0 %v451
    %469 = vmatprep.subr.mxu0 0.0
    %470 = vmatpush1.msra.mxu0 %v452
    %471 = vmatprep.subr.mxu0 0.0
    %472 = vmatpush1.msra.mxu0 %v453
    %473 = vmatprep.subr.mxu0 0.0
    %474 = vmatpush1.msra.mxu0 %v454
    %475 = vmatprep.subr.mxu0 0.0
    %476 = vmatpush1.msra.mxu0 %v455
    %477 = vmatprep.subr.mxu0 0.0
    %478 = vmatpush1.msra.mxu0 %v456
    %479 = vmatprep.subr.mxu0 0.0
    %480 = vmatpush1.msra.mxu0 %v457
    %481 = vmatprep.subr.mxu0 0.0
    %482 = vmatpush1.msra.mxu0 %v458
    %483 = vmatprep.subr.mxu0 0.0
    %484 = vmatpush1.msra.mxu0 %v459
    %485 = vmatprep.subr.mxu0 0.0
    %486 = vmatpush1.msra.mxu0 %v460
    %487 = vmatprep.subr.mxu0 0.0
    %488 = vmatpush1.msra.mxu0 %v461
    %489 = vmatprep.subr.mxu0 0.0
    %490 = vmatpush1.msra.mxu0 %v462
    %491 = vmatprep.subr.mxu0 0.0
    %492 = vmatpush1.msra.mxu0 %v463
    %493 = vmatprep.subr.mxu0 0.0
    %494 = vmatpush1.msra.mxu0 %v464
    %495 = vmatprep.subr.mxu0 0.0
    %496 = vmatpush1.msra.mxu0 %v465
    %497 = vmatprep.subr.mxu0 0.0
    %498 = vmatpush1.msra.mxu0 %v466
    %499 = vmatprep.subr.mxu0 0.0
    %500 = vmatpush1.msra.mxu0 0.0
    %501 = vmatprep.subr.mxu0 0.0
    %502 = vmatpush1.msra.mxu0 0.0
    %503 = vmatprep.subr.mxu0 0.0
    %504 = vmatpush1.msra.mxu0 0.0
    %505 = vmatprep.subr.mxu0 0.0
    %506 = vmatpush1.msra.mxu0 0.0
    %507 = vmatprep.subr.mxu0 0.0
    %508 = vmatpush1.msra.mxu0 0.0
    %509 = vmatprep.subr.mxu0 0.0
    %510 = vmatpush1.msra.mxu0 0.0
    %511 = vmatprep.subr.mxu0 0.0
    %512 = vmatpush1.msra.mxu0 0.0
    %513 = vmatprep.subr.mxu0 0.0
    %514 = vmatpush1.msra.mxu0 0.0
    %515 = vmatprep.subr.mxu0 0.0
    %516 = vmatpush1.msra.mxu0 0.0
    %517 = vmatprep.subr.mxu0 0.0
    %518 = vmatpush1.msra.mxu0 0.0
    %519 = vmatprep.subr.mxu0 0.0
    %520 = vmatpush1.msra.mxu0 0.0
    %521 = vmatprep.subr.mxu0 0.0
    %522 = vmatpush1.msra.mxu0 0.0
    %523 = vmatprep.subr.mxu0 0.0
    %524 = vmatpush1.msra.mxu0 0.0
    %525 = vmatprep.subr.mxu0 0.0
    %526 = vmatpush1.msra.mxu0 0.0
    %527 = vmatprep.subr.mxu0 0.0
    %528 = vmatpush1.msra.mxu0 0.0
    %529 = vmatprep.subr.mxu0 0.0
    %530 = vmatpush1.msra.mxu0 0.0
    %531 = vmatprep.mubr.f32.mxu0 0.0
    %532 = vmatmul.mubr.f32.gmra.mrb[0].mxu0 %v447
    %v533 = vpop.f32.mrb[0].mxu0
    %v534 = vadd.f32 0.0, %v533
    %v535 = vpop.f32.mrb[0].mxu0
    %536 = vmatprep.mubr.f32.mxu0 0.0
    %537 = vmatmul.mubr.f32.gmra.mrb[0].mxu0 %v448
    %v538 = vpop.f32.mrb[0].mxu0
    %v539 = vadd.f32 0.0, %v538
    %v540 = vpop.f32.mrb[0].mxu0
    %541 = vmatprep.mubr.f32.mxu0 0.0
    %542 = vmatmul.mubr.f32.gmra.mrb[0].mxu0 %v449
    %v543 = vpop.f32.mrb[0].mxu0
    %v544 = vadd.f32 0.0, %v543
    %v545 = vpop.f32.mrb[0].mxu0
    %546 = vmatprep.mubr.f32.mxu0 0.0
    %547 = vmatmul.mubr.f32.gmra.mrb[0].mxu0 %v450
    %v548 = vpop.f32.mrb[0].mxu0
    %v549 = vadd.f32 0.0, %v548
    %v550 = vpop.f32.mrb[0].mxu0
    %551 = vdwg.mxu0
    %552 = vmatprep.subr.mxu0 0.0
    %553 = vmatpush1.msra.mxu0 %v415
    %554 = vmatprep.subr.mxu0 0.0
    %555 = vmatpush1.msra.mxu0 %v416
    %556 = vmatprep.subr.mxu0 0.0
    %557 = vmatpush1.msra.mxu0 %v417
    %558 = vmatprep.subr.mxu0 0.0
    %559 = vmatpush1.msra.mxu0 %v418
    %560 = vmatprep.subr.mxu0 0.0
    %561 = vmatpush1.msra.mxu0 %v419
    %562 = vmatprep.subr.mxu0 0.0
    %563 = vmatpush1.msra.mxu0 %v420
    %564 = vmatprep.subr.mxu0 0.0
    %565 = vmatpush1.msra.mxu0 %v421
    %566 = vmatprep.subr.mxu0 0.0
    %567 = vmatpush1.msra.mxu0 %v422
    %568 = vmatprep.subr.mxu0 0.0
    %569 = vmatpush1.msra.mxu0 %v423
    %570 = vmatprep.subr.mxu0 0.0
    %571 = vmatpush1.msra.mxu0 %v424
    %572 = vmatprep.subr.mxu0 0.0
    %573 = vmatpush1.msra.mxu0 %v425
    %574 = vmatprep.subr.mxu0 0.0
    %575 = vmatpush1.msra.mxu0 %v426
    %576 = vmatprep.subr.mxu0 0.0
    %577 = vmatpush1.msra.mxu0 %v427
    %578 = vmatprep.subr.mxu0 0.0
    %579 = vmatpush1.msra.mxu0 %v428
    %580 = vmatprep.subr.mxu0 0.0
    %581 = vmatpush1.msra.mxu0 %v429
    %582 = vmatprep.subr.mxu0 0.0
    %583 = vmatpush1.msra.mxu0 %v430
    %584 = vmatprep.subr.mxu0 0.0
    %585 = vmatpush1.msra.mxu0 %v431
    %586 = vmatprep.subr.mxu0 0.0
    %587 = vmatpush1.msra.mxu0 %v432
    %588 = vmatprep.subr.mxu0 0.0
    %589 = vmatpush1.msra.mxu0 %v433
    %590 = vmatprep.subr.mxu0 0.0
    %591 = vmatpush1.msra.mxu0 %v434
    %592 = vmatprep.subr.mxu0 0.0
    %593 = vmatpush1.msra.mxu0 %v435
    %594 = vmatprep.subr.mxu0 0.0
    %595 = vmatpush1.msra.mxu0 %v436
    %596 = vmatprep.subr.mxu0 0.0
    %597 = vmatpush1.msra.mxu0 %v437
    %598 = vmatprep.subr.mxu0 0.0
    %599 = vmatpush1.msra.mxu0 %v438
    %600 = vmatprep.subr.mxu0 0.0
    %601 = vmatpush1.msra.mxu0 %v439
    %602 = vmatprep.subr.mxu0 0.0
    %603 = vmatpush1.msra.mxu0 %v440
    %604 = vmatprep.subr.mxu0 0.0
    %605 = vmatpush1.msra.mxu0 %v441
    %606 = vmatprep.subr.mxu0 0.0
    %607 = vmatpush1.msra.mxu0 %v442
    %608 = vmatprep.subr.mxu0 0.0
    %609 = vmatpush1.msra.mxu0 %v443
    %610 = vmatprep.subr.mxu0 0.0
    %611 = vmatpush1.msra.mxu0 %v444
    %612 = vmatprep.subr.mxu0 0.0
    %613 = vmatpush1.msra.mxu0 %v445
    %614 = vmatprep.subr.mxu0 0.0
    %615 = vmatpush1.msra.mxu0 %v446
    %616 = vmatprep.mubr.f32.mxu0 %v408
    %617 = vmatmul.mubr.f32.gmra.mrb[0].mxu0 %v407
    %v618 = vpop.f32.mrb[0].mxu0
    %v619 = vadd.f32 %v534, %v618
    %v620 = vpop.f32.mrb[0].mxu0
    %621 = vmatprep.mubr.f32.mxu0 %v410
    %622 = vmatmul.mubr.f32.gmra.mrb[0].mxu0 %v409
    %v623 = vpop.f32.mrb[0].mxu0
    %v624 = vadd.f32 %v539, %v623
    %v625 = vpop.f32.mrb[0].mxu0
    %626 = vmatprep.mubr.f32.mxu0 %v412
    %627 = vmatmul.mubr.f32.gmra.mrb[0].mxu0 %v411
    %v628 = vpop.f32.mrb[0].mxu0
    %v629 = vadd.f32 %v544, %v628
    %v630 = vpop.f32.mrb[0].mxu0
    %631 = vmatprep.mubr.f32.mxu0 %v414
    %632 = vmatmul.mubr.f32.gmra.mrb[0].mxu0 %v413
    %v633 = vpop.f32.mrb[0].mxu0
    %v634 = vadd.f32 %v549, %v633
    %v635 = vpop.f32.mrb[0].mxu0
    %636 = vdwg.mxu0
    %s637 = sld [smem:[#allocation2]]
    %v638 = vstv %s637
    %v639 = vadd.f32 %v619, %v638
    %v640 = vadd.f32 %v624, %v638
    %v641 = vadd.f32 %v629, %v638
    %v642 = vadd.f32 %v634, %v638
    %v643 = vmul.f32 %v639, 1.442695
    %v644 = vpow.pop %v643
    %v645 = vmul.f32 %v640, 1.442695
    %v646 = vpow.pop %v645
    %v647 = vmul.f32 %v641, 1.442695
    %v648 = vpow.pop %v647
    %v649 = vmul.f32 %v642, 1.442695
    %v650 = vpow.pop %v649
    %vm651 = vcmask 64512
    %652 = vst.msk [vmem:[%s9] sm:$0xff] %vm651, %v644
    %653 = vst.msk [vmem:[%s9 + $0x8] sm:$0xff] %vm651, %v646
    %654 = vst.msk [vmem:[%s9 + $0x10] sm:$0xff] %vm651, %v648
    %655 = vst.msk [vmem:[%s9 + $0x18] sm:$0xff] %vm651, %v650
    // Predicated region
    $region46: #{tpu_custom_call.1} parent=1 // pred_check
      _
    $region47: #{tpu_custom_call.1} parent=1 // pred_check_branch
      %657 = sbr.rel (0) target = $region49
    $region48: #{tpu_custom_call.1} parent=1 // pred_region
      _
    $region49: #{tpu_custom_call.1} parent=1 // pred_fallthru
      _
    // Predicated region
    $region50: #{tpu_custom_call.1} parent=1 // pred_check
      _
    $region51: #{tpu_custom_call.1} parent=1 // pred_check_branch
      %659 = sbr.rel (0) target = $region53
    $region52: #{tpu_custom_call.1} parent=1 // pred_region
      _
    $region53: #{tpu_custom_call.1} parent=1 // pred_fallthru
      _
    %660 = vsyncpa [#allocation4], 1
    %661 = vsyncpa [#allocation6], 1

</llo_original>
